<compile_context>
chip_gen: v7x
topology: tpu7x:2x2x1
jax: 0.10.0
libtpu: 0.0.40
codegen_flags: <defaults>
</compile_context>

<pallas_src>
import functools

import jax
import jax.numpy as jnp
from jax.experimental import pallas as pl
from jax.experimental.pallas import tpu as pltpu


def _cdiv(a, b):
    return (a + b - 1) // b


def _round_up(a, b):
    return _cdiv(a, b) * b


def _k_tiling(K, tk):
    """(num K steps, per-step 128-aligned tile, padded K extent)."""
    nk = max(1, _cdiv(K, tk))
    t = _round_up(_cdiv(K, nk), 128)
    return nk, t, nk * t


def dbpnet_kernel(nk_t, x1_ref, x2_ref, wt_ref, wf_ref, b8_ref, wl_ref,
                  bl_ref, o_ref, acc_ref):
    # grid = (batch tiles [parallel], nk_t + nk_f reduction steps [arbitrary]).
    # Steps [0, nk_t) stream the temporal slab, steps [nk_t, nk) the frequency
    # slab -> one dot per step, one live input stream per step.  The inactive
    # stream's index map is held constant so Pallas does NOT re-fetch it.
    k = pl.program_id(1)
    nk = pl.num_programs(1)

    @pl.when(k == 0)
    def _init():
        acc_ref[...] = jnp.zeros_like(acc_ref)

    @pl.when(k < nk_t)
    def _temporal():
        # bf16 x bf16 -> f32 accumulate (native MXU path).  Temporal branch
        # lands in accumulator columns 0:4 (weights zero-padded elsewhere).
        acc_ref[...] += jnp.dot(x1_ref[...], wt_ref[...],
                                preferred_element_type=jnp.float32)

    @pl.when(k >= nk_t)
    def _frequency():
        # Frequency branch lands in accumulator columns 4:8.
        acc_ref[...] += jnp.dot(x2_ref[...], wf_ref[...],
                                preferred_element_type=jnp.float32)

    @pl.when(k == nk - 1)
    def _finalize():
        feat = jnp.maximum(acc_ref[...] + b8_ref[...], 0.0)       # bias + ReLU
        out = jnp.dot(feat, wl_ref[...],
                      preferred_element_type=jnp.float32) + bl_ref[...]
        o_ref[...] = out.astype(o_ref.dtype)


def prepare_params(params, in_channels, T, H, W, *, tk=2048):
    """One-time parameter preparation (hoisted out of the per-call forward).

    Folds the 1/T (resp. 1/HW) mean-pool scaling into row-repeated, K-padded
    bf16 weights; temporal weights occupy output columns 0:4 and frequency
    weights columns 4:8 (== torch.cat((seq, fre), dim=1)).
    """
    HW = H * W
    Kt, Kf = in_channels * T, in_channels * HW
    _, _, kt_pad = _k_tiling(Kt, tk)
    _, _, kf_pad = _k_tiling(Kf, tk)

    wt8 = jnp.pad(jnp.repeat(params["w_t"] / T, T, axis=0),
                  ((0, kt_pad - Kt), (0, 4))).astype(jnp.bfloat16)
    wf8 = jnp.pad(jnp.repeat(params["w_f"] / HW, HW, axis=0),
                  ((0, kf_pad - Kf), (4, 0))).astype(jnp.bfloat16)
    b8 = jnp.concatenate([params["b_t"], params["b_f"]],
                         axis=1).astype(jnp.float32)                # (1, 8)
    return {
        "wt8": wt8,                                                 # (kt_pad, 8)
        "wf8": wf8,                                                 # (kf_pad, 8)
        "b8": b8,
        "w_lin": params["w_lin"].astype(jnp.float32),               # (8, 2)
        "b_lin": params["b_lin"].astype(jnp.float32),               # (1, 2)
    }


@functools.partial(jax.jit, static_argnames=("tb", "tk"))
def m_dbpnet_forward(x1, x2, prep, *, tb=128, tk=2048):
    B, C, T = x1.shape
    _, _, H, W = x2.shape
    Kt, Kf = C * T, C * H * W

    nk_t, tkt, kt_pad = _k_tiling(Kt, tk)
    nk_f, tkf, kf_pad = _k_tiling(Kf, tk)
    assert prep["wt8"].shape == (kt_pad, 8), "prepare_params used a different tk"
    assert prep["wf8"].shape == (kf_pad, 8), "prepare_params used a different tk"

    # Batch tile: bf16 needs sublane multiples of 16; cap so batches >= 32
    # produce >= 2 parallel blocks (keeps both v7x TensorCores busy).
    # TODO(synk): for tiny B on v7x, split the K axis across the two cores
    #             with two partial accumulators instead.
    tb = max(16, min(tb, _round_up(_cdiv(B, 2), 16)))
    b_pad = _round_up(B, tb)
    nb = b_pad // tb

    # bf16 cast fused with the zero padding by XLA -> a single HBM pass per
    # input (the cast is needed anyway; padding adds only the pad bytes).
    # Zero padding is exact: padded rows/cols contribute nothing to the sums.
    x1p = jnp.pad(x1.reshape(B, Kt).astype(jnp.bfloat16),
                  ((0, b_pad - B), (0, kt_pad - Kt)))
    x2p = jnp.pad(x2.reshape(B, Kf).astype(jnp.bfloat16),
                  ((0, b_pad - B), (0, kf_pad - Kf)))

    grid = (nb, nk_t + nk_f)

    # VMEM: double-buffered bf16 input tiles + weight tiles + f32 scratch/out.
    vmem_est = (2 * 2 * tb * (tkt + tkf)          # x tiles, 2 bufs, bf16
                + 2 * 2 * 8 * (tkt + tkf)         # fused weights, 2 bufs, bf16
                + 4 * tb * 8 + 2 * 4 * tb * 2 + 4096)
    vmem_limit = int(min(48 * 1024 * 1024, max(16 * 1024 * 1024, 2 * vmem_est)))

    cost = pl.CostEstimate(
        flops=2 * b_pad * 8 * (kt_pad + kf_pad) + 2 * b_pad * 8 * 2,
        transcendentals=0,
        bytes_accessed=(2 * b_pad * (kt_pad + kf_pad)      # bf16 inputs
                        + 2 * 8 * (kt_pad + kf_pad)        # bf16 weights
                        + 4 * b_pad * 2),                  # f32 output
    )

    # NOTE: if profiling shows exposed DMA per step, the two x BlockSpecs can
    # take pipeline_mode=pl.Buffered(3) (re-check VMEM on v7x's 64 MiB).
    out = pl.pallas_call(
        functools.partial(dbpnet_kernel, nk_t),
        out_shape=jax.ShapeDtypeStruct((b_pad, 2), jnp.float32),
        grid_spec=pltpu.PrefetchScalarGridSpec(
            num_scalar_prefetch=0,
            grid=grid,
            in_specs=[
                # temporal slab: advances during steps [0, nk_t), then held.
                pl.BlockSpec((tb, tkt),
                             lambda b, k: (b, jnp.minimum(k, nk_t - 1))),
                # frequency slab: held at block 0, then advances.
                pl.BlockSpec((tb, tkf),
                             lambda b, k: (b, jnp.maximum(k - nk_t, 0))),
                pl.BlockSpec((tkt, 8),
                             lambda b, k: (jnp.minimum(k, nk_t - 1), 0)),
                pl.BlockSpec((tkf, 8),
                             lambda b, k: (jnp.maximum(k - nk_t, 0), 0)),
                pl.BlockSpec((1, 8), lambda b, k: (0, 0)),   # [b_t | b_f]
                pl.BlockSpec((8, 2), lambda b, k: (0, 0)),   # final Linear W
                pl.BlockSpec((1, 2), lambda b, k: (0, 0)),   # final Linear b
            ],
            out_specs=pl.BlockSpec((tb, 2), lambda b, k: (b, 0)),
            scratch_shapes=[pltpu.VMEM((tb, 8), jnp.float32)],
        ),
        compiler_params=pltpu.CompilerParams(
            dimension_semantics=("parallel", "arbitrary"),
            vmem_limit_bytes=vmem_limit,
        ),
        cost_estimate=cost,
    )(x1p, x2p, prep["wt8"], prep["wf8"], prep["b8"],
      prep["w_lin"], prep["b_lin"])

    return out[:B]


def init_params(key, in_channels):
    k1, k2, k3 = jax.random.split(key, 3)
    # Linear weights ~ N(0, 0.01), biases = 0  (matches _initialize_weights)
    return {
        "w_t": 0.01 * jax.random.normal(k1, (in_channels, 4), jnp.float32),
        "b_t": jnp.zeros((1, 4), jnp.float32),
        "w_f": 0.01 * jax.random.normal(k2, (in_channels, 4), jnp.float32),
        "b_f": jnp.zeros((1, 4), jnp.float32),
        "w_lin": 0.01 * jax.random.normal(k3, (8, 2), jnp.float32),
        "b_lin": jnp.zeros((1, 2), jnp.float32),
    }


def reference_forward(x1, x2, p):
    # Pure-JAX f32 reference of the same semantics (for correctness check).
    t_feat = jnp.maximum(jnp.mean(x1, axis=-1) @ p["w_t"] + p["b_t"], 0.0)
    f_feat = jnp.maximum(
        jnp.mean(x2.reshape(x2.shape[0], x2.shape[1], -1), axis=-1)
        @ p["w_f"] + p["b_f"], 0.0)
    cat = jnp.concatenate([t_feat, f_feat], axis=1)
    return cat @ p["w_lin"] + p["b_lin"]


if __name__ == "__main__":
    B, C, T = 2, 4, 16
    H = W = 16

    key = jax.random.PRNGKey(0)
    kx1, kx2, kp = jax.random.split(key, 3)
    x1 = jax.random.normal(kx1, (B, C, T), jnp.float32)
    x2 = jax.random.normal(kx2, (B, C, H, W), jnp.float32)
    params = init_params(kp, C)

    prep = prepare_params(params, C, T, H, W)      # one-time weight prep
    out = m_dbpnet_forward(x1, x2, prep)
    out = jax.block_until_ready(out)

    ref = reference_forward(x1, x2, params)
    assert out.shape == (B, 2)
    # bf16 inputs/weights (f32 accumulation) -> loose-ish tolerance vs f32 ref.
    assert jnp.allclose(out, ref, atol=1e-3, rtol=5e-2), (out, ref)
    print("KERNEL_OK")
</pallas_src>

<mosaic_0001>
module attributes {stable_mosaic.version = 11 : i64} {
  func.func @dbpnet_kernel(%arg0: i32, %arg1: i32, %arg2: memref<16x128xbf16, #tpu.memory_space<vmem>>, %arg3: memref<16x1024xbf16, #tpu.memory_space<vmem>>, %arg4: memref<128x8xbf16, #tpu.memory_space<vmem>>, %arg5: memref<1024x8xbf16, #tpu.memory_space<vmem>>, %arg6: memref<1x8xf32, #tpu.memory_space<vmem>>, %arg7: memref<8x2xf32, #tpu.memory_space<vmem>>, %arg8: memref<1x2xf32, #tpu.memory_space<vmem>>, %arg9: memref<16x2xf32, #tpu.memory_space<vmem>>, %arg10: memref<16x8xf32, #tpu.memory_space<vmem>>) attributes {dimension_semantics = [#tpu.dimension_semantics<parallel>, #tpu.dimension_semantics<arbitrary>], iteration_bounds = array<i64: 1, 2>, scalar_prefetch = 0 : i64, scratch_operands = 1 : i64, tpu.core_type = #tpu.core_type<tc>, window_params = [{transform_indices = @transform_0, window_bounds = array<i64: 16, 128>}, {transform_indices = @transform_1, window_bounds = array<i64: 16, 1024>}, {transform_indices = @transform_2, window_bounds = array<i64: 128, 8>}, {transform_indices = @transform_3, window_bounds = array<i64: 1024, 8>}, {pipeline_mode = #tpu.pipeline_mode<synchronous>, transform_indices = @transform_4, window_bounds = array<i64: 1, 8>}, {pipeline_mode = #tpu.pipeline_mode<synchronous>, transform_indices = @transform_5, window_bounds = array<i64: 8, 2>}, {pipeline_mode = #tpu.pipeline_mode<synchronous>, transform_indices = @transform_6, window_bounds = array<i64: 1, 2>}, {transform_indices = @transform_7, window_bounds = array<i64: 16, 2>}]} {
    %c0_i32 = arith.constant 0 : i32
    %0 = arith.cmpi eq, %arg1, %c0_i32 : i32
    %1 = arith.extui %0 : i1 to i32
    %c0_i32_0 = arith.constant 0 : i32
    %2 = arith.cmpi ne, %1, %c0_i32_0 : i32
    scf.if %2 {
      %cst = arith.constant 0.000000e+00 : f32
      %12 = vector.broadcast %cst : f32 to vector<16x8xf32>
      %c0 = arith.constant 0 : index
      %c0_6 = arith.constant 0 : index
      %13 = vector.load %arg10[%c0, %c0_6] : memref<16x8xf32, #tpu.memory_space<vmem>>, vector<16x8xf32>
      tpu.vector_store %arg10[%c0, %c0_6], %12 {strides = array<i32>} : memref<16x8xf32, #tpu.memory_space<vmem>>, vector<16x8xf32>,
    } else {
    }
    %c1_i32 = arith.constant 1 : i32
    %3 = arith.cmpi slt, %arg1, %c1_i32 : i32
    %4 = arith.extui %3 : i1 to i32
    %c0_i32_1 = arith.constant 0 : i32
    %5 = arith.cmpi ne, %4, %c0_i32_1 : i32
    scf.if %5 {
      %c0 = arith.constant 0 : index
      %c0_6 = arith.constant 0 : index
      %12 = vector.load %arg10[%c0, %c0_6] : memref<16x8xf32, #tpu.memory_space<vmem>>, vector<16x8xf32>
      %c0_7 = arith.constant 0 : index
      %c0_8 = arith.constant 0 : index
      %13 = vector.load %arg2[%c0_7, %c0_8] : memref<16x128xbf16, #tpu.memory_space<vmem>>, vector<16x128xbf16>
      %c0_9 = arith.constant 0 : index
      %c0_10 = arith.constant 0 : index
      %14 = vector.load %arg4[%c0_9, %c0_10] : memref<128x8xbf16, #tpu.memory_space<vmem>>, vector<128x8xbf16>
      %cst = arith.constant dense<0.000000e+00> : vector<16x8xf32>
      %15 = tpu.matmul %13, %14, %cst {dimension_numbers = #tpu.dot_dimension_numbers<[1], [0], [0], [1], [0, 0, 1, 1], [], []>} : vector<16x128xbf16>, vector<128x8xbf16>, vector<16x8xf32> -> vector<16x8xf32>
      %16 = arith.addf %12, %15 : vector<16x8xf32>
      %c0_11 = arith.constant 0 : index
      %c0_12 = arith.constant 0 : index
      %17 = vector.load %arg10[%c0_11, %c0_12] : memref<16x8xf32, #tpu.memory_space<vmem>>, vector<16x8xf32>
      tpu.vector_store %arg10[%c0_11, %c0_12], %16 {strides = array<i32>} : memref<16x8xf32, #tpu.memory_space<vmem>>, vector<16x8xf32>,
    } else {
    }
    %c1_i32_2 = arith.constant 1 : i32
    %6 = arith.cmpi sge, %arg1, %c1_i32_2 : i32
    %7 = arith.extui %6 : i1 to i32
    %c0_i32_3 = arith.constant 0 : i32
    %8 = arith.cmpi ne, %7, %c0_i32_3 : i32
    scf.if %8 {
      %c0 = arith.constant 0 : index
      %c0_6 = arith.constant 0 : index
      %12 = vector.load %arg10[%c0, %c0_6] : memref<16x8xf32, #tpu.memory_space<vmem>>, vector<16x8xf32>
      %c0_7 = arith.constant 0 : index
      %c0_8 = arith.constant 0 : index
      %13 = vector.load %arg3[%c0_7, %c0_8] : memref<16x1024xbf16, #tpu.memory_space<vmem>>, vector<16x1024xbf16>
      %c0_9 = arith.constant 0 : index
      %c0_10 = arith.constant 0 : index
      %14 = vector.load %arg5[%c0_9, %c0_10] : memref<1024x8xbf16, #tpu.memory_space<vmem>>, vector<1024x8xbf16>
      %cst = arith.constant dense<0.000000e+00> : vector<16x8xf32>
      %15 = tpu.matmul %13, %14, %cst {dimension_numbers = #tpu.dot_dimension_numbers<[1], [0], [0], [1], [0, 0, 1, 1], [], []>} : vector<16x1024xbf16>, vector<1024x8xbf16>, vector<16x8xf32> -> vector<16x8xf32>
      %16 = arith.addf %12, %15 : vector<16x8xf32>
      %c0_11 = arith.constant 0 : index
      %c0_12 = arith.constant 0 : index
      %17 = vector.load %arg10[%c0_11, %c0_12] : memref<16x8xf32, #tpu.memory_space<vmem>>, vector<16x8xf32>
      tpu.vector_store %arg10[%c0_11, %c0_12], %16 {strides = array<i32>} : memref<16x8xf32, #tpu.memory_space<vmem>>, vector<16x8xf32>,
    } else {
    }
    %c1_i32_4 = arith.constant 1 : i32
    %9 = arith.cmpi eq, %arg1, %c1_i32_4 : i32
    %10 = arith.extui %9 : i1 to i32
    %c0_i32_5 = arith.constant 0 : i32
    %11 = arith.cmpi ne, %10, %c0_i32_5 : i32
    scf.if %11 {
      %c0 = arith.constant 0 : index
      %c0_6 = arith.constant 0 : index
      %12 = vector.load %arg10[%c0, %c0_6] : memref<16x8xf32, #tpu.memory_space<vmem>>, vector<16x8xf32>
      %c0_7 = arith.constant 0 : index
      %c0_8 = arith.constant 0 : index
      %13 = vector.load %arg6[%c0_7, %c0_8] : memref<1x8xf32, #tpu.memory_space<vmem>>, vector<1x8xf32>
      %14 = vector.broadcast %13 : vector<1x8xf32> to vector<16x8xf32>
      %15 = arith.addf %12, %14 : vector<16x8xf32>
      %cst = arith.constant 0.000000e+00 : f32
      %16 = vector.broadcast %cst : f32 to vector<16x8xf32>
      %17 = arith.maximumf %15, %16 : vector<16x8xf32>
      %c0_9 = arith.constant 0 : index
      %c0_10 = arith.constant 0 : index
      %18 = vector.load %arg7[%c0_9, %c0_10] : memref<8x2xf32, #tpu.memory_space<vmem>>, vector<8x2xf32>
      %cst_11 = arith.constant dense<0.000000e+00> : vector<16x2xf32>
      %19 = tpu.matmul %17, %18, %cst_11 {dimension_numbers = #tpu.dot_dimension_numbers<[1], [0], [0], [1], [0, 0, 1, 1], [], []>} : vector<16x8xf32>, vector<8x2xf32>, vector<16x2xf32> -> vector<16x2xf32>
      %c0_12 = arith.constant 0 : index
      %c0_13 = arith.constant 0 : index
      %20 = vector.load %arg8[%c0_12, %c0_13] : memref<1x2xf32, #tpu.memory_space<vmem>>, vector<1x2xf32>
      %21 = vector.broadcast %20 : vector<1x2xf32> to vector<16x2xf32>
      %22 = arith.addf %19, %21 : vector<16x2xf32>
      %c0_14 = arith.constant 0 : index
      %c0_15 = arith.constant 0 : index
      %23 = vector.load %arg9[%c0_14, %c0_15] : memref<16x2xf32, #tpu.memory_space<vmem>>, vector<16x2xf32>
      tpu.vector_store %arg9[%c0_14, %c0_15], %22 {strides = array<i32>} : memref<16x2xf32, #tpu.memory_space<vmem>>, vector<16x2xf32>,
    } else {
    }
    return
  }
  func.func @transform_0(%arg0: i32, %arg1: i32) -> (i32, i32) {
    %c0_i32 = arith.constant 0 : i32
    %0 = arith.minsi %arg1, %c0_i32 : i32
    %c0_i32_0 = arith.constant 0 : i32
    return %arg0, %0 : i32, i32
  }
  func.func @transform_1(%arg0: i32, %arg1: i32) -> (i32, i32) {
    %c1_i32 = arith.constant 1 : i32
    %0 = arith.subi %arg1, %c1_i32 : i32
    %c0_i32 = arith.constant 0 : i32
    %1 = arith.maxsi %0, %c0_i32 : i32
    %c0_i32_0 = arith.constant 0 : i32
    return %arg0, %1 : i32, i32
  }
  func.func @transform_2(%arg0: i32, %arg1: i32) -> (i32, i32) {
    %c0_i32 = arith.constant 0 : i32
    %0 = arith.minsi %arg1, %c0_i32 : i32
    %c0_i32_0 = arith.constant 0 : i32
    %c0_i32_1 = arith.constant 0 : i32
    return %0, %c0_i32_0 : i32, i32
  }
  func.func @transform_3(%arg0: i32, %arg1: i32) -> (i32, i32) {
    %c1_i32 = arith.constant 1 : i32
    %0 = arith.subi %arg1, %c1_i32 : i32
    %c0_i32 = arith.constant 0 : i32
    %1 = arith.maxsi %0, %c0_i32 : i32
    %c0_i32_0 = arith.constant 0 : i32
    %c0_i32_1 = arith.constant 0 : i32
    return %1, %c0_i32_0 : i32, i32
  }
  func.func @transform_4(%arg0: i32, %arg1: i32) -> (i32, i32) {
    %c0_i32 = arith.constant 0 : i32
    %c0_i32_0 = arith.constant 0 : i32
    %c0_i32_1 = arith.constant 0 : i32
    return %c0_i32, %c0_i32_0 : i32, i32
  }
  func.func @transform_5(%arg0: i32, %arg1: i32) -> (i32, i32) {
    %c0_i32 = arith.constant 0 : i32
    %c0_i32_0 = arith.constant 0 : i32
    %c0_i32_1 = arith.constant 0 : i32
    return %c0_i32, %c0_i32_0 : i32, i32
  }
  func.func @transform_6(%arg0: i32, %arg1: i32) -> (i32, i32) {
    %c0_i32 = arith.constant 0 : i32
    %c0_i32_0 = arith.constant 0 : i32
    %c0_i32_1 = arith.constant 0 : i32
    return %c0_i32, %c0_i32_0 : i32, i32
  }
  func.func @transform_7(%arg0: i32, %arg1: i32) -> (i32, i32) {
    %c0_i32 = arith.constant 0 : i32
    %c0_i32_0 = arith.constant 0 : i32
    return %arg0, %c0_i32 : i32, i32
  }
}

</mosaic_0001>

<llo_original>
// kernel: m_dbpnet_forward.1
$region0: #{m_dbpnet_forward.1}
  #allocation0 [shape = 'u32[]', space=smem, size = 0x4, offset = 0x4, fixed_abs, tag = 'smem constant byte address 0x4 - core index']
  #allocation1 [shape = 'u32[144,128]{1,0:T(1,128)}', space=vmem, size = 0x12000, scoped, tag = 'internal scratch']
  #allocation2 [shape = 'f32[16,8]{1,0:T(8,128)}', space=vmem, size = 0x2000, scoped, tag = 'scratch operand']
  %s0 = inlined_call_operand.vmem [shape: bf16[16,128], index: 0, kind: input, shape index: {}]
  %s1 = inlined_call_operand.vmem [shape: bf16[16,1024], index: 1, kind: input, shape index: {}]
  %s2 = inlined_call_operand.vmem [shape: bf16[128,8], index: 2, kind: input, shape index: {}]
  %s3 = inlined_call_operand.vmem [shape: bf16[1024,8], index: 3, kind: input, shape index: {}]
  %s4 = inlined_call_operand.vmem [shape: f32[1,8], index: 4, kind: input, shape index: {}]
  %s5 = inlined_call_operand.vmem [shape: f32[8,2], index: 5, kind: input, shape index: {}]
  %s6 = inlined_call_operand.vmem [shape: f32[1,2], index: 6, kind: input, shape index: {}]
  %s7 = inlined_call_operand.vmem [shape: f32[16,2], index: 7, kind: output, shape index: {}]
  %s8 = sld [smem:[#allocation0]]
  $region77: #{m_dbpnet_forward.1} parent=0
    _
  %s10 = ssub.s32 1, %s8
  %s11 = scalar_select 0, %s10, %s8
  loop: start=0, step=1, limit=4
  $region2: #{m_dbpnet_forward.1} parent=0 // loop_pre_header
    _
  $region3: #{m_dbpnet_forward.1} parent=0 // loop_header
    %s13 = sphi 0, %s17
    %p14 = scmp.ge.s32.totalorder %s13, 4
    %s20 = sphi 0, %s32
    %s21 = sphi 0, %s28
    %s22 = sphi 0, %s20
    %s23 = sphi 0, %s21
    %s24 = sphi 0, %s22
    %s25 = sphi 0, %s23
    %s41 = sphi 0, %s43
    %s44 = sphi 0, %s41
    %s45 = sphi 0, %s44
    %s61 = sphi 0, %s45
    %s75 = sphi 0, %s77
    %s78 = sphi 0, %s75
    %s79 = sphi 0, %s78
    %s95 = sphi 0, %s79
    %s105 = sphi 0, %s107
    %s108 = sphi 0, %s105
    %s109 = sphi 0, %s108
    %s125 = sphi 0, %s109
    %s137 = sphi 0, %s139
    %s140 = sphi 0, %s137
    %s141 = sphi 0, %s140
    %s157 = sphi 0, %s141
    %s161 = sphi 0, %s161
    %s163 = sphi 0, %s161
    %s164 = sphi 0, %s163
    %s178 = sphi 0, %s164
    %s182 = sphi 0, %s182
    %s184 = sphi 0, %s182
    %s185 = sphi 0, %s184
    %s199 = sphi 0, %s185
    %s203 = sphi 0, %s203
    %s205 = sphi 0, %s203
    %s206 = sphi 0, %s205
    %s220 = sphi 0, %s206
    %s226 = sphi 0, %s228
    %s229 = sphi 0, %s226
    %s230 = sphi 0, %s229
    %s246 = sphi 0, %s230
  $region4: #{m_dbpnet_forward.1} parent=0 // loop_header_branch
    %16 = sbr.rel (%p14) target = $region8
  $region5: #{m_dbpnet_forward.1} parent=0 // loop_body
    %s18 = ssub.s32 %s13, 1
    %s19 = ssub.s32 %s13, 2
    %s26 = sadd.s32 1, %s21
    %p27 = scmp.ge.s32.totalorder %s26, 2
    %s28 = scalar_select %p27, 0, %s26
    %s29 = sadd.s32 1, %s20
    %s30 = scalar_select %p27, %s29, %s20
    %p31 = scmp.ge.s32.totalorder %s30, 1
    %s32 = scalar_select %p31, 0, %s30
    %p33 = scmp.lt.s32.totalorder %s21, 0
    %s34 = scalar_select %p33, %s21, 0
    %p35 = scmp.lt.s32.totalorder %s28, 0
    %s36 = scalar_select %p35, %s28, 0
    %s37 = ssub.s32 %s20, %s32
    %s38 = ssub.s32 %s34, %s36
    %s39 = sor.u32 %s37, %s38
    %p40 = scmp.eq.s32.totalorder %s39, 0
    %s42 = sadd.s32 %s41, 1
    %s43 = scalar_select %p40, %s41, %s42
    %p46 = pneg %p40
    %p47 = scmp.eq.s32.totalorder %s13, 1
    %p48 = por %p46, %p47
    %p49 = scmp.ne.s32.totalorder %s41, %s44
    %p50 = scmp.eq.s32.totalorder %s13, 0
    %p51 = por %p49, %p50
    %p52 = scmp.ne.s32.totalorder %s41, %s44
    %p53 = scmp.eq.s32.totalorder %s18, 1
    %p54 = por %p52, %p53
    %p55 = scmp.ne.s32.totalorder %s44, %s45
    %p56 = scmp.eq.s32.totalorder %s18, 0
    %p57 = por %p55, %p56
    %p58 = scmp.ne.s32.totalorder %s44, %s45
    %p59 = scmp.eq.s32.totalorder %s19, 1
    %p60 = por %p58, %p59
    %p62 = scmp.ne.s32.totalorder %s45, %s61
    %p63 = scmp.eq.s32.totalorder %s19, 0
    %p64 = por %p62, %p63
    %s65 = ssub.s32 %s21, 1
    %p66 = scmp.gt.s32.totalorder %s65, 0
    %s67 = scalar_select %p66, %s65, 0
    %s68 = ssub.s32 %s28, 1
    %p69 = scmp.gt.s32.totalorder %s68, 0
    %s70 = scalar_select %p69, %s68, 0
    %s71 = ssub.s32 %s20, %s32
    %s72 = ssub.s32 %s67, %s70
    %s73 = sor.u32 %s71, %s72
    %p74 = scmp.eq.s32.totalorder %s73, 0
    %s76 = sadd.s32 %s75, 1
    %s77 = scalar_select %p74, %s75, %s76
    %p80 = pneg %p74
    %p81 = scmp.eq.s32.totalorder %s13, 1
    %p82 = por %p80, %p81
    %p83 = scmp.ne.s32.totalorder %s75, %s78
    %p84 = scmp.eq.s32.totalorder %s13, 0
    %p85 = por %p83, %p84
    %p86 = scmp.ne.s32.totalorder %s75, %s78
    %p87 = scmp.eq.s32.totalorder %s18, 1
    %p88 = por %p86, %p87
    %p89 = scmp.ne.s32.totalorder %s78, %s79
    %p90 = scmp.eq.s32.totalorder %s18, 0
    %p91 = por %p89, %p90
    %p92 = scmp.ne.s32.totalorder %s78, %s79
    %p93 = scmp.eq.s32.totalorder %s19, 1
    %p94 = por %p92, %p93
    %p96 = scmp.ne.s32.totalorder %s79, %s95
    %p97 = scmp.eq.s32.totalorder %s19, 0
    %p98 = por %p96, %p97
    %p99 = scmp.lt.s32.totalorder %s21, 0
    %s100 = scalar_select %p99, %s21, 0
    %p101 = scmp.lt.s32.totalorder %s28, 0
    %s102 = scalar_select %p101, %s28, 0
    %s103 = ssub.s32 %s100, %s102
    %p104 = scmp.eq.s32.totalorder %s103, 0
    %s106 = sadd.s32 %s105, 1
    %s107 = scalar_select %p104, %s105, %s106
    %p110 = pneg %p104
    %p111 = scmp.eq.s32.totalorder %s13, 1
    %p112 = por %p110, %p111
    %p113 = scmp.ne.s32.totalorder %s105, %s108
    %p114 = scmp.eq.s32.totalorder %s13, 0
    %p115 = por %p113, %p114
    %p116 = scmp.ne.s32.totalorder %s105, %s108
    %p117 = scmp.eq.s32.totalorder %s18, 1
    %p118 = por %p116, %p117
    %p119 = scmp.ne.s32.totalorder %s108, %s109
    %p120 = scmp.eq.s32.totalorder %s18, 0
    %p121 = por %p119, %p120
    %p122 = scmp.ne.s32.totalorder %s108, %s109
    %p123 = scmp.eq.s32.totalorder %s19, 1
    %p124 = por %p122, %p123
    %p126 = scmp.ne.s32.totalorder %s109, %s125
    %p127 = scmp.eq.s32.totalorder %s19, 0
    %p128 = por %p126, %p127
    %s129 = ssub.s32 %s21, 1
    %p130 = scmp.gt.s32.totalorder %s129, 0
    %s131 = scalar_select %p130, %s129, 0
    %s132 = ssub.s32 %s28, 1
    %p133 = scmp.gt.s32.totalorder %s132, 0
    %s134 = scalar_select %p133, %s132, 0
    %s135 = ssub.s32 %s131, %s134
    %p136 = scmp.eq.s32.totalorder %s135, 0
    %s138 = sadd.s32 %s137, 1
    %s139 = scalar_select %p136, %s137, %s138
    %p142 = pneg %p136
    %p143 = scmp.eq.s32.totalorder %s13, 1
    %p144 = por %p142, %p143
    %p145 = scmp.ne.s32.totalorder %s137, %s140
    %p146 = scmp.eq.s32.totalorder %s13, 0
    %p147 = por %p145, %p146
    %p148 = scmp.ne.s32.totalorder %s137, %s140
    %p149 = scmp.eq.s32.totalorder %s18, 1
    %p150 = por %p148, %p149
    %p151 = scmp.ne.s32.totalorder %s140, %s141
    %p152 = scmp.eq.s32.totalorder %s18, 0
    %p153 = por %p151, %p152
    %p154 = scmp.ne.s32.totalorder %s140, %s141
    %p155 = scmp.eq.s32.totalorder %s19, 1
    %p156 = por %p154, %p155
    %p158 = scmp.ne.s32.totalorder %s141, %s157
    %p159 = scmp.eq.s32.totalorder %s19, 0
    %p160 = por %p158, %p159
    %s162 = sadd.s32 %s161, 1
    %p165 = scmp.eq.s32.totalorder %s13, 1
    %p166 = scmp.ne.s32.totalorder %s161, %s163
    %p167 = scmp.eq.s32.totalorder %s13, 0
    %p168 = por %p166, %p167
    %p169 = scmp.ne.s32.totalorder %s161, %s163
    %p170 = scmp.eq.s32.totalorder %s18, 1
    %p171 = por %p169, %p170
    %p172 = scmp.ne.s32.totalorder %s163, %s164
    %p173 = scmp.eq.s32.totalorder %s18, 0
    %p174 = por %p172, %p173
    %p175 = scmp.ne.s32.totalorder %s163, %s164
    %p176 = scmp.eq.s32.totalorder %s19, 1
    %p177 = por %p175, %p176
    %p179 = scmp.ne.s32.totalorder %s164, %s178
    %p180 = scmp.eq.s32.totalorder %s19, 0
    %p181 = por %p179, %p180
    %s183 = sadd.s32 %s182, 1
    %p186 = scmp.eq.s32.totalorder %s13, 1
    %p187 = scmp.ne.s32.totalorder %s182, %s184
    %p188 = scmp.eq.s32.totalorder %s13, 0
    %p189 = por %p187, %p188
    %p190 = scmp.ne.s32.totalorder %s182, %s184
    %p191 = scmp.eq.s32.totalorder %s18, 1
    %p192 = por %p190, %p191
    %p193 = scmp.ne.s32.totalorder %s184, %s185
    %p194 = scmp.eq.s32.totalorder %s18, 0
    %p195 = por %p193, %p194
    %p196 = scmp.ne.s32.totalorder %s184, %s185
    %p197 = scmp.eq.s32.totalorder %s19, 1
    %p198 = por %p196, %p197
    %p200 = scmp.ne.s32.totalorder %s185, %s199
    %p201 = scmp.eq.s32.totalorder %s19, 0
    %p202 = por %p200, %p201
    %s204 = sadd.s32 %s203, 1
    %p207 = scmp.eq.s32.totalorder %s13, 1
    %p208 = scmp.ne.s32.totalorder %s203, %s205
    %p209 = scmp.eq.s32.totalorder %s13, 0
    %p210 = por %p208, %p209
    %p211 = scmp.ne.s32.totalorder %s203, %s205
    %p212 = scmp.eq.s32.totalorder %s18, 1
    %p213 = por %p211, %p212
    %p214 = scmp.ne.s32.totalorder %s205, %s206
    %p215 = scmp.eq.s32.totalorder %s18, 0
    %p216 = por %p214, %p215
    %p217 = scmp.ne.s32.totalorder %s205, %s206
    %p218 = scmp.eq.s32.totalorder %s19, 1
    %p219 = por %p217, %p218
    %p221 = scmp.ne.s32.totalorder %s206, %s220
    %p222 = scmp.eq.s32.totalorder %s19, 0
    %p223 = por %p221, %p222
    %s224 = ssub.s32 %s20, %s32
    %p225 = scmp.eq.s32.totalorder %s224, 0
    %s227 = sadd.s32 %s226, 1
    %s228 = scalar_select %p225, %s226, %s227
    %p231 = pneg %p225
    %p232 = scmp.eq.s32.totalorder %s13, 1
    %p233 = por %p231, %p232
    %p234 = scmp.ne.s32.totalorder %s226, %s229
    %p235 = scmp.eq.s32.totalorder %s13, 0
    %p236 = por %p234, %p235
    %p237 = scmp.ne.s32.totalorder %s226, %s229
    %p238 = scmp.eq.s32.totalorder %s18, 1
    %p239 = por %p237, %p238
    %p240 = scmp.ne.s32.totalorder %s229, %s230
    %p241 = scmp.eq.s32.totalorder %s18, 0
    %p242 = por %p240, %p241
    %p243 = scmp.ne.s32.totalorder %s229, %s230
    %p244 = scmp.eq.s32.totalorder %s19, 1
    %p245 = por %p243, %p244
    %p247 = scmp.ne.s32.totalorder %s230, %s246
    %p248 = scmp.eq.s32.totalorder %s19, 0
    %p249 = por %p247, %p248
    %p250 = scmp.le.s32.totalorder 1, %s13
    %p251 = scmp.lt.s32.totalorder %s13, 3
    %p252 = pnand %p250, %p251
    %p253 = pneg %p252
    // Predicated region
    $region9: #{m_dbpnet_forward.1} parent=5 // pred_check
      _
    $region10: #{m_dbpnet_forward.1} parent=5 // pred_check_branch
      %255 = sbr.rel (%p252) target = $region12
    $region11: #{m_dbpnet_forward.1} parent=5 // pred_region
      %s256 = ssub.s32 %s13, 1
      // Predicated region
      $region13: #{m_dbpnet_forward.1} parent=11 // pred_check
        %p257 = pneg %p174
      $region14: #{m_dbpnet_forward.1} parent=11 // pred_check_branch
        %259 = sbr.rel (%p257) target = $region16
      $region15: #{m_dbpnet_forward.1} parent=11 // pred_region
        _
      $region16: #{m_dbpnet_forward.1} parent=11 // pred_fallthru
        _
      // Predicated region
      $region17: #{m_dbpnet_forward.1} parent=11 // pred_check
        %p260 = pneg %p195
      $region18: #{m_dbpnet_forward.1} parent=11 // pred_check_branch
        %262 = sbr.rel (%p260) target = $region20
      $region19: #{m_dbpnet_forward.1} parent=11 // pred_region
        _
      $region20: #{m_dbpnet_forward.1} parent=11 // pred_fallthru
        _
      // Predicated region
      $region21: #{m_dbpnet_forward.1} parent=11 // pred_check
        %p263 = pneg %p216
      $region22: #{m_dbpnet_forward.1} parent=11 // pred_check_branch
        %265 = sbr.rel (%p263) target = $region24
      $region23: #{m_dbpnet_forward.1} parent=11 // pred_region
        _
      $region24: #{m_dbpnet_forward.1} parent=11 // pred_fallthru
        _
    $region12: #{m_dbpnet_forward.1} parent=5 // pred_fallthru
      _
    %p266 = scmp.lt.s32.totalorder %s13, 2
    // Predicated region
    $region25: #{m_dbpnet_forward.1} parent=5 // pred_check
      %p267 = pneg %p266
    $region26: #{m_dbpnet_forward.1} parent=5 // pred_check_branch
      %269 = sbr.rel (%p267) target = $region28
    $region27: #{m_dbpnet_forward.1} parent=5 // pred_region
      // Predicated region
      $region29: #{m_dbpnet_forward.1} parent=27 // pred_check
        %p270 = pneg %p51
      $region30: #{m_dbpnet_forward.1} parent=27 // pred_check_branch
        %272 = sbr.rel (%p270) target = $region32
      $region31: #{m_dbpnet_forward.1} parent=27 // pred_region
        %p273 = scmp.lt.s32.totalorder %s21, 0
        %s274 = scalar_select %p273, %s21, 0
        %s275 = smul.u32 2, %s20
        %p276 = scmp.lt.s32.totalorder %s275, 1
        %s277 = scalar_select %p276, %s275, 1
        %p278 = scmp.lt.s32.totalorder %s274, 0
        %s279 = scalar_select %p278, %s274, 0
        %s280 = sadd.s32 %s279, %s277
        %s281 = smul.addr %s280, 4
        %s282 = scalar_lea.vmem %s0, %s281
        %p283 = scmp.lt.s32.totalorder %s21, 0
        %s284 = scalar_select %p283, %s21, 0
        %s285 = smul.u32 2, %s20
      $region32: #{m_dbpnet_forward.1} parent=27 // pred_fallthru
        _
      // Predicated region
      $region33: #{m_dbpnet_forward.1} parent=27 // pred_check
        %p286 = pneg %p85
      $region34: #{m_dbpnet_forward.1} parent=27 // pred_check_branch
        %288 = sbr.rel (%p286) target = $region36
      $region35: #{m_dbpnet_forward.1} parent=27 // pred_region
        %s289 = ssub.s32 %s21, 1
        %p290 = scmp.gt.s32.totalorder %s289, 0
        %s291 = scalar_select %p290, %s289, 0
        %s292 = smul.u32 2, %s20
        %s293 = smul.u32 8, %s291
        %p294 = scmp.lt.s32.totalorder %s292, 1
        %s295 = scalar_select %p294, %s292, 1
        %p296 = scmp.lt.s32.totalorder %s293, 7
        %s297 = scalar_select %p296, %s293, 7
        %s298 = smul.addr %s295, 8
        %s299 = sadd.s32 %s297, %s298
        %s300 = smul.addr %s299, 4
        %s301 = scalar_lea.vmem %s1, %s300
        %s302 = ssub.s32 %s21, 1
        %p303 = scmp.gt.s32.totalorder %s302, 0
        %s304 = scalar_select %p303, %s302, 0
        %s305 = smul.u32 2, %s20
        %s306 = smul.u32 8, %s304
      $region36: #{m_dbpnet_forward.1} parent=27 // pred_fallthru
        _
      // Predicated region
      $region37: #{m_dbpnet_forward.1} parent=27 // pred_check
        %p307 = pneg %p115
      $region38: #{m_dbpnet_forward.1} parent=27 // pred_check_branch
        %309 = sbr.rel (%p307) target = $region40
      $region39: #{m_dbpnet_forward.1} parent=27 // pred_region
        %p310 = scmp.lt.s32.totalorder %s21, 0
        %s311 = scalar_select %p310, %s21, 0
        %s312 = smul.u32 16, %s311
        %p313 = scmp.lt.s32.totalorder %s312, 15
        %s314 = scalar_select %p313, %s312, 15
        %s315 = smul.addr %s314, 4
        %s316 = scalar_lea.vmem %s2, %s315
        %p317 = scmp.lt.s32.totalorder %s21, 0
        %s318 = scalar_select %p317, %s21, 0
        %s319 = smul.u32 16, %s318
      $region40: #{m_dbpnet_forward.1} parent=27 // pred_fallthru
        _
      // Predicated region
      $region41: #{m_dbpnet_forward.1} parent=27 // pred_check
        %p320 = pneg %p147
      $region42: #{m_dbpnet_forward.1} parent=27 // pred_check_branch
        %322 = sbr.rel (%p320) target = $region44
      $region43: #{m_dbpnet_forward.1} parent=27 // pred_region
        %s323 = ssub.s32 %s21, 1
        %p324 = scmp.gt.s32.totalorder %s323, 0
        %s325 = scalar_select %p324, %s323, 0
        %s326 = smul.u32 128, %s325
        %p327 = scmp.lt.s32.totalorder %s326, 127
        %s328 = scalar_select %p327, %s326, 127
        %s329 = smul.addr %s328, 4
        %s330 = scalar_lea.vmem %s3, %s329
        %s331 = ssub.s32 %s21, 1
        %p332 = scmp.gt.s32.totalorder %s331, 0
        %s333 = scalar_select %p332, %s331, 0
        %s334 = smul.u32 128, %s333
      $region44: #{m_dbpnet_forward.1} parent=27 // pred_fallthru
        _
    $region28: #{m_dbpnet_forward.1} parent=5 // pred_fallthru
      _
    %p335 = scmp.le.s32.totalorder 1, %s13
    %p336 = scmp.lt.s32.totalorder %s13, 3
    %p337 = pnand %p335, %p336
    %p338 = pneg %p337
    // Predicated region
    $region45: #{m_dbpnet_forward.1} parent=5 // pred_check
      _
    $region46: #{m_dbpnet_forward.1} parent=5 // pred_check_branch
      %340 = sbr.rel (%p337) target = $region48
    $region47: #{m_dbpnet_forward.1} parent=5 // pred_region
      %s341 = ssub.s32 %s13, 1
      %p342 = scmp.lt.s32.totalorder %s23, 0
      %s343 = scalar_select %p342, %s23, 0
      %s344 = smul.u32 2, %s22
      %p345 = scmp.lt.s32.totalorder %s344, 1
      %s346 = scalar_select %p345, %s344, 1
      %p347 = scmp.lt.s32.totalorder %s343, 0
      %s348 = scalar_select %p347, %s343, 0
      %s349 = sadd.s32 %s348, %s346
      %s350 = smul.addr %s349, 4
      %s351 = scalar_lea.vmem %s0, %s350
      %p352 = pneg %p57
      %p353 = pneg %p54
      %s354 = ssub.s32 %s23, 1
      %p355 = scmp.gt.s32.totalorder %s354, 0
      %s356 = scalar_select %p355, %s354, 0
      %s357 = smul.u32 2, %s22
      %s358 = smul.u32 8, %s356
      %p359 = scmp.lt.s32.totalorder %s357, 1
      %s360 = scalar_select %p359, %s357, 1
      %p361 = scmp.lt.s32.totalorder %s358, 7
      %s362 = scalar_select %p361, %s358, 7
      %s363 = smul.addr %s360, 8
      %s364 = sadd.s32 %s362, %s363
      %s365 = smul.addr %s364, 4
      %s366 = scalar_lea.vmem %s1, %s365
      %p367 = pneg %p91
      %p368 = pneg %p88
      %p369 = scmp.lt.s32.totalorder %s23, 0
      %s370 = scalar_select %p369, %s23, 0
      %s371 = smul.u32 16, %s370
      %p372 = scmp.lt.s32.totalorder %s371, 15
      %s373 = scalar_select %p372, %s371, 15
      %s374 = smul.addr %s373, 4
      %s375 = scalar_lea.vmem %s2, %s374
      %p376 = pneg %p121
      %p377 = pneg %p118
      %s378 = ssub.s32 %s23, 1
      %p379 = scmp.gt.s32.totalorder %s378, 0
      %s380 = scalar_select %p379, %s378, 0
      %s381 = smul.u32 128, %s380
      %p382 = scmp.lt.s32.totalorder %s381, 127
      %s383 = scalar_select %p382, %s381, 127
      %s384 = smul.addr %s383, 4
      %s385 = scalar_lea.vmem %s3, %s384
      %p386 = pneg %p153
      %p387 = pneg %p150
      %p388 = pneg %p174
      %p389 = pneg %p171
      %p390 = pneg %p195
      %p391 = pneg %p192
      %p392 = pneg %p216
      %p393 = pneg %p213
      %p394 = pneg %p242
      %p395 = pneg %p239
      %s396 = smul.u32 2, %s22
      %p397 = scmp.lt.s32.totalorder %s396, 1
      %s398 = scalar_select %p397, %s396, 1
      %s399 = smul.addr %s398, 8
      %s400 = scalar_lea.vmem %s7, %s399
      %p401 = scmp.lt.s32.totalorder %s23, 0
      %s402 = scalar_select %p401, %s23, 0
      %s403 = smul.u32 2, %s22
      %p404 = scmp.lt.s32.totalorder %s403, 1
      %s405 = scalar_select %p404, %s403, 1
      %p406 = scmp.lt.s32.totalorder %s402, 0
      %s407 = scalar_select %p406, %s402, 0
      %s408 = sadd.s32 %s407, %s405
      %s409 = smul.addr %s408, 4
      %s410 = scalar_lea.vmem %s0, %s409
      %p411 = scmp.lt.s32.totalorder %s23, 0
      %s412 = scalar_select %p411, %s23, 0
      %s413 = smul.u32 2, %s22
      %s414 = ssub.s32 %s23, 1
      %p415 = scmp.gt.s32.totalorder %s414, 0
      %s416 = scalar_select %p415, %s414, 0
      %s417 = smul.u32 2, %s22
      %s418 = smul.u32 8, %s416
      %p419 = scmp.lt.s32.totalorder %s417, 1
      %s420 = scalar_select %p419, %s417, 1
      %p421 = scmp.lt.s32.totalorder %s418, 7
      %s422 = scalar_select %p421, %s418, 7
      %s423 = smul.addr %s420, 8
      %s424 = sadd.s32 %s422, %s423
      %s425 = smul.addr %s424, 4
      %s426 = scalar_lea.vmem %s1, %s425
      %s427 = ssub.s32 %s23, 1
      %p428 = scmp.gt.s32.totalorder %s427, 0
      %s429 = scalar_select %p428, %s427, 0
      %s430 = smul.u32 2, %s22
      %s431 = smul.u32 8, %s429
      %p432 = scmp.lt.s32.totalorder %s23, 0
      %s433 = scalar_select %p432, %s23, 0
      %s434 = smul.u32 16, %s433
      %p435 = scmp.lt.s32.totalorder %s434, 15
      %s436 = scalar_select %p435, %s434, 15
      %s437 = smul.addr %s436, 4
      %s438 = scalar_lea.vmem %s2, %s437
      %p439 = scmp.lt.s32.totalorder %s23, 0
      %s440 = scalar_select %p439, %s23, 0
      %s441 = smul.u32 16, %s440
      %s442 = ssub.s32 %s23, 1
      %p443 = scmp.gt.s32.totalorder %s442, 0
      %s444 = scalar_select %p443, %s442, 0
      %s445 = smul.u32 128, %s444
      %p446 = scmp.lt.s32.totalorder %s445, 127
      %s447 = scalar_select %p446, %s445, 127
      %s448 = smul.addr %s447, 4
      %s449 = scalar_lea.vmem %s3, %s448
      %s450 = ssub.s32 %s23, 1
      %p451 = scmp.gt.s32.totalorder %s450, 0
      %s452 = scalar_select %p451, %s450, 0
      %s453 = smul.u32 128, %s452
      %s454 = smul.u32 2, %s22
      %p455 = scmp.lt.s32.totalorder %s454, 1
      %s456 = scalar_select %p455, %s454, 1
      %s457 = smul.addr %s456, 8
      %s458 = scalar_lea.vmem %s7, %s457
      %s459 = smul.u32 2, %s22
      %p461 = scmp.eq.s32.totalorder %s23, 0
      // Predicated region
      $region49: #{m_dbpnet_forward.1} parent=47 // pred_check
        %p462 = pneg %p461
      $region50: #{m_dbpnet_forward.1} parent=47 // pred_check_branch
        %464 = sbr.rel (%p462) target = $region52
      $region51: #{m_dbpnet_forward.1} parent=47 // pred_region
        %vm465 = vcmask 64512
        %466 = vst.msk [vmem:[#allocation2] sm:$0xff] %vm465, 0.0
        %467 = vst.msk [vmem:[#allocation2 + $0x8] sm:$0xff] %vm465, 0.0
      $region52: #{m_dbpnet_forward.1} parent=47 // pred_fallthru
        _
      %p468 = scmp.lt.s32.totalorder %s23, 1
      // Predicated region
      $region53: #{m_dbpnet_forward.1} parent=47 // pred_check
        %p469 = pneg %p468
      $region54: #{m_dbpnet_forward.1} parent=47 // pred_check_branch
        %471 = sbr.rel (%p469) target = $region56
      $region55: #{m_dbpnet_forward.1} parent=47 // pred_region
        %v472 = vld [vmem:[#allocation2] sm:$0xff]
        %v473 = vld [vmem:[#allocation2 + $0x8] sm:$0xff]
        %v474 = vld [vmem:[%s410] sm:$0xf]
        %v475 = vld [vmem:[%s410 + $0x4] sm:$0xf]
        %v476 = vld [vmem:[%s438] sm:$0xf]
        %v477 = vld [vmem:[%s438 + $0x4] sm:$0xf]
        %v478 = vld [vmem:[%s438 + $0x8] sm:$0xf]
        %v479 = vld [vmem:[%s438 + $0xc] sm:$0xf]
        %v480 = vld [vmem:[%s438 + $0x10] sm:$0xf]
        %v481 = vld [vmem:[%s438 + $0x14] sm:$0xf]
        %v482 = vld [vmem:[%s438 + $0x18] sm:$0xf]
        %v483 = vld [vmem:[%s438 + $0x1c] sm:$0xf]
        %v484 = vld [vmem:[%s438 + $0x20] sm:$0xf]
        %v485 = vld [vmem:[%s438 + $0x24] sm:$0xf]
        %v486 = vld [vmem:[%s438 + $0x28] sm:$0xf]
        %v487 = vld [vmem:[%s438 + $0x2c] sm:$0xf]
        %v488 = vld [vmem:[%s438 + $0x30] sm:$0xf]
        %v489 = vld [vmem:[%s438 + $0x34] sm:$0xf]
        %v490 = vld [vmem:[%s438 + $0x38] sm:$0xf]
        %v491 = vld [vmem:[%s438 + $0x3c] sm:$0xf]
        %v494 = vunpack.c.l.b16 %v474
        %v495 = vunpack.c.l.b16 %v475
        %v496 = vpack.c.b16 %v495, %v494
        %v514 = vunpack.c.l.b16 %v476
        %v515 = vunpack.c.l.b16 %v477
        %v516 = vunpack.c.l.b16 %v478
        %v517 = vunpack.c.l.b16 %v479
        %v518 = vunpack.c.l.b16 %v480
        %v519 = vunpack.c.l.b16 %v481
        %v520 = vunpack.c.l.b16 %v482
        %v521 = vunpack.c.l.b16 %v483
        %v522 = vunpack.c.l.b16 %v484
        %v523 = vunpack.c.l.b16 %v485
        %v524 = vunpack.c.l.b16 %v486
        %v525 = vunpack.c.l.b16 %v487
        %v526 = vunpack.c.l.b16 %v488
        %v527 = vunpack.c.l.b16 %v489
        %v528 = vunpack.c.l.b16 %v490
        %v529 = vunpack.c.l.b16 %v491
        %v530 = vpack.c.b16 %v515, %v514
        %v531 = vpack.c.b16 %v517, %v516
        %v532 = vpack.c.b16 %v519, %v518
        %v533 = vpack.c.b16 %v521, %v520
        %v534 = vpack.c.b16 %v523, %v522
        %v535 = vpack.c.b16 %v525, %v524
        %v536 = vpack.c.b16 %v527, %v526
        %v537 = vpack.c.b16 %v529, %v528
        %546 = vmatprep.subr.bf16.mxu0 0
        %547 = vmatpush1.bf16.msra.mxu0 %v530
        %548 = vmatprep.subr.bf16.mxu0 0
        %549 = vmatpush1.bf16.msra.mxu0 %v531
        %550 = vmatprep.subr.bf16.mxu0 0
        %551 = vmatpush1.bf16.msra.mxu0 %v532
        %552 = vmatprep.subr.bf16.mxu0 0
        %553 = vmatpush1.bf16.msra.mxu0 %v533
        %554 = vmatprep.subr.bf16.mxu0 0
        %555 = vmatpush1.bf16.msra.mxu0 %v534
        %556 = vmatprep.subr.bf16.mxu0 0
        %557 = vmatpush1.bf16.msra.mxu0 %v535
        %558 = vmatprep.subr.bf16.mxu0 0
        %559 = vmatpush1.bf16.msra.mxu0 %v536
        %560 = vmatprep.subr.bf16.mxu0 0
        %561 = vmatpush1.bf16.msra.mxu0 %v537
        %562 = vmatprep.subr.bf16.mxu0 0
        %563 = vmatpush1.bf16.msra.mxu0 0
        %564 = vmatprep.subr.bf16.mxu0 0
        %565 = vmatpush1.bf16.msra.mxu0 0
        %566 = vmatprep.subr.bf16.mxu0 0
        %567 = vmatpush1.bf16.msra.mxu0 0
        %568 = vmatprep.subr.bf16.mxu0 0
        %569 = vmatpush1.bf16.msra.mxu0 0
        %570 = vmatprep.subr.bf16.mxu0 0
        %571 = vmatpush1.bf16.msra.mxu0 0
        %572 = vmatprep.subr.bf16.mxu0 0
        %573 = vmatpush1.bf16.msra.mxu0 0
        %574 = vmatprep.subr.bf16.mxu0 0
        %575 = vmatpush1.bf16.msra.mxu0 0
        %576 = vmatprep.subr.bf16.mxu0 0
        %577 = vmatpush1.bf16.msra.mxu0 0
        %578 = vmatprep.mubr.bf16.mxu0 0
        %579 = vmatmul.mubr.bf16.gmra.mrb[0].mxu0 %v496
        %v580 = vpop.f32.mrb[0].mxu0
        %v581 = vadd.f32 0.0, %v580
        %v582 = vpop.f32.mrb[0].mxu0
        %v583 = vpop.f32.mrb[0].mxu0
        %v584 = vadd.f32 0.0, %v583
        %v585 = vpop.f32.mrb[0].mxu0
        %586 = vdwg.mxu0
        %v587 = vadd.f32 %v472, %v581
        %v588 = vadd.f32 %v473, %v584
        %vm589 = vcmask 64512
        %590 = vst.msk [vmem:[#allocation2] sm:$0xff] %vm589, %v587
        %591 = vst.msk [vmem:[#allocation2 + $0x8] sm:$0xff] %vm589, %v588
      $region56: #{m_dbpnet_forward.1} parent=47 // pred_fallthru
        _
      %p592 = scmp.ge.s32.totalorder %s23, 1
      // Predicated region
      $region57: #{m_dbpnet_forward.1} parent=47 // pred_check
        %p593 = pneg %p592
      $region58: #{m_dbpnet_forward.1} parent=47 // pred_check_branch
        %595 = sbr.rel (%p593) target = $region60
      $region59: #{m_dbpnet_forward.1} parent=47 // pred_region
        %v596 = vld [vmem:[#allocation2] sm:$0xff]
        %v597 = vld [vmem:[#allocation2 + $0x8] sm:$0xff]
        %v598 = vld [vmem:[%s426] sm:$0xff]
        %v599 = vld [vmem:[%s426 + $0x8] sm:$0xff]
        %v600 = vld [vmem:[%s426 + $0x10] sm:$0xff]
        %v601 = vld [vmem:[%s426 + $0x18] sm:$0xff]
        %v602 = vld [vmem:[%s426 + $0x20] sm:$0xff]
        %v603 = vld [vmem:[%s426 + $0x28] sm:$0xff]
        %v604 = vld [vmem:[%s426 + $0x30] sm:$0xff]
        %v605 = vld [vmem:[%s426 + $0x38] sm:$0xff]
        %v606 = vld [vmem:[%s449] sm:$0xf]
        %v607 = vld [vmem:[%s449 + $0x4] sm:$0xf]
        %v608 = vld [vmem:[%s449 + $0x8] sm:$0xf]
        %v609 = vld [vmem:[%s449 + $0xc] sm:$0xf]
        %v610 = vld [vmem:[%s449 + $0x10] sm:$0xf]
        %v611 = vld [vmem:[%s449 + $0x14] sm:$0xf]
        %v612 = vld [vmem:[%s449 + $0x18] sm:$0xf]
        %v613 = vld [vmem:[%s449 + $0x1c] sm:$0xf]
        %v614 = vld [vmem:[%s449 + $0x20] sm:$0xf]
        %v615 = vld [vmem:[%s449 + $0x24] sm:$0xf]
        %v616 = vld [vmem:[%s449 + $0x28] sm:$0xf]
        %v617 = vld [vmem:[%s449 + $0x2c] sm:$0xf]
        %v618 = vld [vmem:[%s449 + $0x30] sm:$0xf]
        %v619 = vld [vmem:[%s449 + $0x34] sm:$0xf]
        %v620 = vld [vmem:[%s449 + $0x38] sm:$0xf]
        %v621 = vld [vmem:[%s449 + $0x3c] sm:$0xf]
        %v622 = vld [vmem:[%s449 + $0x40] sm:$0xf]
        %v623 = vld [vmem:[%s449 + $0x44] sm:$0xf]
        %v624 = vld [vmem:[%s449 + $0x48] sm:$0xf]
        %v625 = vld [vmem:[%s449 + $0x4c] sm:$0xf]
        %v626 = vld [vmem:[%s449 + $0x50] sm:$0xf]
        %v627 = vld [vmem:[%s449 + $0x54] sm:$0xf]
        %v628 = vld [vmem:[%s449 + $0x58] sm:$0xf]
        %v629 = vld [vmem:[%s449 + $0x5c] sm:$0xf]
        %v630 = vld [vmem:[%s449 + $0x60] sm:$0xf]
        %v631 = vld [vmem:[%s449 + $0x64] sm:$0xf]
        %v632 = vld [vmem:[%s449 + $0x68] sm:$0xf]
        %v633 = vld [vmem:[%s449 + $0x6c] sm:$0xf]
        %v634 = vld [vmem:[%s449 + $0x70] sm:$0xf]
        %v635 = vld [vmem:[%s449 + $0x74] sm:$0xf]
        %v636 = vld [vmem:[%s449 + $0x78] sm:$0xf]
        %v637 = vld [vmem:[%s449 + $0x7c] sm:$0xf]
        %v638 = vld [vmem:[%s449 + $0x80] sm:$0xf]
        %v639 = vld [vmem:[%s449 + $0x84] sm:$0xf]
        %v640 = vld [vmem:[%s449 + $0x88] sm:$0xf]
        %v641 = vld [vmem:[%s449 + $0x8c] sm:$0xf]
        %v642 = vld [vmem:[%s449 + $0x90] sm:$0xf]
        %v643 = vld [vmem:[%s449 + $0x94] sm:$0xf]
        %v644 = vld [vmem:[%s449 + $0x98] sm:$0xf]
        %v645 = vld [vmem:[%s449 + $0x9c] sm:$0xf]
        %v646 = vld [vmem:[%s449 + $0xa0] sm:$0xf]
        %v647 = vld [vmem:[%s449 + $0xa4] sm:$0xf]
        %v648 = vld [vmem:[%s449 + $0xa8] sm:$0xf]
        %v649 = vld [vmem:[%s449 + $0xac] sm:$0xf]
        %v650 = vld [vmem:[%s449 + $0xb0] sm:$0xf]
        %v651 = vld [vmem:[%s449 + $0xb4] sm:$0xf]
        %v652 = vld [vmem:[%s449 + $0xb8] sm:$0xf]
        %v653 = vld [vmem:[%s449 + $0xbc] sm:$0xf]
        %v654 = vld [vmem:[%s449 + $0xc0] sm:$0xf]
        %v655 = vld [vmem:[%s449 + $0xc4] sm:$0xf]
        %v656 = vld [vmem:[%s449 + $0xc8] sm:$0xf]
        %v657 = vld [vmem:[%s449 + $0xcc] sm:$0xf]
        %v658 = vld [vmem:[%s449 + $0xd0] sm:$0xf]
        %v659 = vld [vmem:[%s449 + $0xd4] sm:$0xf]
        %v660 = vld [vmem:[%s449 + $0xd8] sm:$0xf]
        %v661 = vld [vmem:[%s449 + $0xdc] sm:$0xf]
        %v662 = vld [vmem:[%s449 + $0xe0] sm:$0xf]
        %v663 = vld [vmem:[%s449 + $0xe4] sm:$0xf]
        %v664 = vld [vmem:[%s449 + $0xe8] sm:$0xf]
        %v665 = vld [vmem:[%s449 + $0xec] sm:$0xf]
        %v666 = vld [vmem:[%s449 + $0xf0] sm:$0xf]
        %v667 = vld [vmem:[%s449 + $0xf4] sm:$0xf]
        %v668 = vld [vmem:[%s449 + $0xf8] sm:$0xf]
        %v669 = vld [vmem:[%s449 + $0xfc] sm:$0xf]
        %v670 = vld [vmem:[%s449 + $0x100] sm:$0xf]
        %v671 = vld [vmem:[%s449 + $0x104] sm:$0xf]
        %v672 = vld [vmem:[%s449 + $0x108] sm:$0xf]
        %v673 = vld [vmem:[%s449 + $0x10c] sm:$0xf]
        %v674 = vld [vmem:[%s449 + $0x110] sm:$0xf]
        %v675 = vld [vmem:[%s449 + $0x114] sm:$0xf]
        %v676 = vld [vmem:[%s449 + $0x118] sm:$0xf]
        %v677 = vld [vmem:[%s449 + $0x11c] sm:$0xf]
        %v678 = vld [vmem:[%s449 + $0x120] sm:$0xf]
        %v679 = vld [vmem:[%s449 + $0x124] sm:$0xf]
        %v680 = vld [vmem:[%s449 + $0x128] sm:$0xf]
        %v681 = vld [vmem:[%s449 + $0x12c] sm:$0xf]
        %v682 = vld [vmem:[%s449 + $0x130] sm:$0xf]
        %v683 = vld [vmem:[%s449 + $0x134] sm:$0xf]
        %v684 = vld [vmem:[%s449 + $0x138] sm:$0xf]
        %v685 = vld [vmem:[%s449 + $0x13c] sm:$0xf]
        %v686 = vld [vmem:[%s449 + $0x140] sm:$0xf]
        %v687 = vld [vmem:[%s449 + $0x144] sm:$0xf]
        %v688 = vld [vmem:[%s449 + $0x148] sm:$0xf]
        %v689 = vld [vmem:[%s449 + $0x14c] sm:$0xf]
        %v690 = vld [vmem:[%s449 + $0x150] sm:$0xf]
        %v691 = vld [vmem:[%s449 + $0x154] sm:$0xf]
        %v692 = vld [vmem:[%s449 + $0x158] sm:$0xf]
        %v693 = vld [vmem:[%s449 + $0x15c] sm:$0xf]
        %v694 = vld [vmem:[%s449 + $0x160] sm:$0xf]
        %v695 = vld [vmem:[%s449 + $0x164] sm:$0xf]
        %v696 = vld [vmem:[%s449 + $0x168] sm:$0xf]
        %v697 = vld [vmem:[%s449 + $0x16c] sm:$0xf]
        %v698 = vld [vmem:[%s449 + $0x170] sm:$0xf]
        %v699 = vld [vmem:[%s449 + $0x174] sm:$0xf]
        %v700 = vld [vmem:[%s449 + $0x178] sm:$0xf]
        %v701 = vld [vmem:[%s449 + $0x17c] sm:$0xf]
        %v702 = vld [vmem:[%s449 + $0x180] sm:$0xf]
        %v703 = vld [vmem:[%s449 + $0x184] sm:$0xf]
        %v704 = vld [vmem:[%s449 + $0x188] sm:$0xf]
        %v705 = vld [vmem:[%s449 + $0x18c] sm:$0xf]
        %v706 = vld [vmem:[%s449 + $0x190] sm:$0xf]
        %v707 = vld [vmem:[%s449 + $0x194] sm:$0xf]
        %v708 = vld [vmem:[%s449 + $0x198] sm:$0xf]
        %v709 = vld [vmem:[%s449 + $0x19c] sm:$0xf]
        %v710 = vld [vmem:[%s449 + $0x1a0] sm:$0xf]
        %v711 = vld [vmem:[%s449 + $0x1a4] sm:$0xf]
        %v712 = vld [vmem:[%s449 + $0x1a8] sm:$0xf]
        %v713 = vld [vmem:[%s449 + $0x1ac] sm:$0xf]
        %v714 = vld [vmem:[%s449 + $0x1b0] sm:$0xf]
        %v715 = vld [vmem:[%s449 + $0x1b4] sm:$0xf]
        %v716 = vld [vmem:[%s449 + $0x1b8] sm:$0xf]
        %v717 = vld [vmem:[%s449 + $0x1bc] sm:$0xf]
        %v718 = vld [vmem:[%s449 + $0x1c0] sm:$0xf]
        %v719 = vld [vmem:[%s449 + $0x1c4] sm:$0xf]
        %v720 = vld [vmem:[%s449 + $0x1c8] sm:$0xf]
        %v721 = vld [vmem:[%s449 + $0x1cc] sm:$0xf]
        %v722 = vld [vmem:[%s449 + $0x1d0] sm:$0xf]
        %v723 = vld [vmem:[%s449 + $0x1d4] sm:$0xf]
        %v724 = vld [vmem:[%s449 + $0x1d8] sm:$0xf]
        %v725 = vld [vmem:[%s449 + $0x1dc] sm:$0xf]
        %v726 = vld [vmem:[%s449 + $0x1e0] sm:$0xf]
        %v727 = vld [vmem:[%s449 + $0x1e4] sm:$0xf]
        %v728 = vld [vmem:[%s449 + $0x1e8] sm:$0xf]
        %v729 = vld [vmem:[%s449 + $0x1ec] sm:$0xf]
        %v730 = vld [vmem:[%s449 + $0x1f0] sm:$0xf]
        %v731 = vld [vmem:[%s449 + $0x1f4] sm:$0xf]
        %v732 = vld [vmem:[%s449 + $0x1f8] sm:$0xf]
        %v733 = vld [vmem:[%s449 + $0x1fc] sm:$0xf]
        %v742 = vunpack.c.l.b16 %v598
        %v743 = vunpack.c.h.b16 %v598
        %v744 = vunpack.c.l.b16 %v599
        %v745 = vunpack.c.h.b16 %v599
        %v746 = vunpack.c.l.b16 %v600
        %v747 = vunpack.c.h.b16 %v600
        %v748 = vunpack.c.l.b16 %v601
        %v749 = vunpack.c.h.b16 %v601
        %v750 = vunpack.c.l.b16 %v602
        %v751 = vunpack.c.h.b16 %v602
        %v752 = vunpack.c.l.b16 %v603
        %v753 = vunpack.c.h.b16 %v603
        %v754 = vunpack.c.l.b16 %v604
        %v755 = vunpack.c.h.b16 %v604
        %v756 = vunpack.c.l.b16 %v605
        %v757 = vunpack.c.h.b16 %v605
        %v758 = vpack.c.b16 %v750, %v742
        %v759 = vpack.c.b16 %v751, %v743
        %v760 = vpack.c.b16 %v752, %v744
        %v761 = vpack.c.b16 %v753, %v745
        %v762 = vpack.c.b16 %v754, %v746
        %v763 = vpack.c.b16 %v755, %v747
        %v764 = vpack.c.b16 %v756, %v748
        %v765 = vpack.c.b16 %v757, %v749
        %v902 = vunpack.c.l.b16 %v606
        %v903 = vunpack.c.l.b16 %v607
        %v904 = vunpack.c.l.b16 %v608
        %v905 = vunpack.c.l.b16 %v609
        %v906 = vunpack.c.l.b16 %v610
        %v907 = vunpack.c.l.b16 %v611
        %v908 = vunpack.c.l.b16 %v612
        %v909 = vunpack.c.l.b16 %v613
        %v910 = vunpack.c.l.b16 %v614
        %v911 = vunpack.c.l.b16 %v615
        %v912 = vunpack.c.l.b16 %v616
        %v913 = vunpack.c.l.b16 %v617
        %v914 = vunpack.c.l.b16 %v618
        %v915 = vunpack.c.l.b16 %v619
        %v916 = vunpack.c.l.b16 %v620
        %v917 = vunpack.c.l.b16 %v621
        %v918 = vunpack.c.l.b16 %v622
        %v919 = vunpack.c.l.b16 %v623
        %v920 = vunpack.c.l.b16 %v624
        %v921 = vunpack.c.l.b16 %v625
        %v922 = vunpack.c.l.b16 %v626
        %v923 = vunpack.c.l.b16 %v627
        %v924 = vunpack.c.l.b16 %v628
        %v925 = vunpack.c.l.b16 %v629
        %v926 = vunpack.c.l.b16 %v630
        %v927 = vunpack.c.l.b16 %v631
        %v928 = vunpack.c.l.b16 %v632
        %v929 = vunpack.c.l.b16 %v633
        %v930 = vunpack.c.l.b16 %v634
        %v931 = vunpack.c.l.b16 %v635
        %v932 = vunpack.c.l.b16 %v636
        %v933 = vunpack.c.l.b16 %v637
        %v934 = vunpack.c.l.b16 %v638
        %v935 = vunpack.c.l.b16 %v639
        %v936 = vunpack.c.l.b16 %v640
        %v937 = vunpack.c.l.b16 %v641
        %v938 = vunpack.c.l.b16 %v642
        %v939 = vunpack.c.l.b16 %v643
        %v940 = vunpack.c.l.b16 %v644
        %v941 = vunpack.c.l.b16 %v645
        %v942 = vunpack.c.l.b16 %v646
        %v943 = vunpack.c.l.b16 %v647
        %v944 = vunpack.c.l.b16 %v648
        %v945 = vunpack.c.l.b16 %v649
        %v946 = vunpack.c.l.b16 %v650
        %v947 = vunpack.c.l.b16 %v651
        %v948 = vunpack.c.l.b16 %v652
        %v949 = vunpack.c.l.b16 %v653
        %v950 = vunpack.c.l.b16 %v654
        %v951 = vunpack.c.l.b16 %v655
        %v952 = vunpack.c.l.b16 %v656
        %v953 = vunpack.c.l.b16 %v657
        %v954 = vunpack.c.l.b16 %v658
        %v955 = vunpack.c.l.b16 %v659
        %v956 = vunpack.c.l.b16 %v660
        %v957 = vunpack.c.l.b16 %v661
        %v958 = vunpack.c.l.b16 %v662
        %v959 = vunpack.c.l.b16 %v663
        %v960 = vunpack.c.l.b16 %v664
        %v961 = vunpack.c.l.b16 %v665
        %v962 = vunpack.c.l.b16 %v666
        %v963 = vunpack.c.l.b16 %v667
        %v964 = vunpack.c.l.b16 %v668
        %v965 = vunpack.c.l.b16 %v669
        %v966 = vunpack.c.l.b16 %v670
        %v967 = vunpack.c.l.b16 %v671
        %v968 = vunpack.c.l.b16 %v672
        %v969 = vunpack.c.l.b16 %v673
        %v970 = vunpack.c.l.b16 %v674
        %v971 = vunpack.c.l.b16 %v675
        %v972 = vunpack.c.l.b16 %v676
        %v973 = vunpack.c.l.b16 %v677
        %v974 = vunpack.c.l.b16 %v678
        %v975 = vunpack.c.l.b16 %v679
        %v976 = vunpack.c.l.b16 %v680
        %v977 = vunpack.c.l.b16 %v681
        %v978 = vunpack.c.l.b16 %v682
        %v979 = vunpack.c.l.b16 %v683
        %v980 = vunpack.c.l.b16 %v684
        %v981 = vunpack.c.l.b16 %v685
        %v982 = vunpack.c.l.b16 %v686
        %v983 = vunpack.c.l.b16 %v687
        %v984 = vunpack.c.l.b16 %v688
        %v985 = vunpack.c.l.b16 %v689
        %v986 = vunpack.c.l.b16 %v690
        %v987 = vunpack.c.l.b16 %v691
        %v988 = vunpack.c.l.b16 %v692
        %v989 = vunpack.c.l.b16 %v693
        %v990 = vunpack.c.l.b16 %v694
        %v991 = vunpack.c.l.b16 %v695
        %v992 = vunpack.c.l.b16 %v696
        %v993 = vunpack.c.l.b16 %v697
        %v994 = vunpack.c.l.b16 %v698
        %v995 = vunpack.c.l.b16 %v699
        %v996 = vunpack.c.l.b16 %v700
        %v997 = vunpack.c.l.b16 %v701
        %v998 = vunpack.c.l.b16 %v702
        %v999 = vunpack.c.l.b16 %v703
        %v1000 = vunpack.c.l.b16 %v704
        %v1001 = vunpack.c.l.b16 %v705
        %v1002 = vunpack.c.l.b16 %v706
        %v1003 = vunpack.c.l.b16 %v707
        %v1004 = vunpack.c.l.b16 %v708
        %v1005 = vunpack.c.l.b16 %v709
        %v1006 = vunpack.c.l.b16 %v710
        %v1007 = vunpack.c.l.b16 %v711
        %v1008 = vunpack.c.l.b16 %v712
        %v1009 = vunpack.c.l.b16 %v713
        %v1010 = vunpack.c.l.b16 %v714
        %v1011 = vunpack.c.l.b16 %v715
        %v1012 = vunpack.c.l.b16 %v716
        %v1013 = vunpack.c.l.b16 %v717
        %v1014 = vunpack.c.l.b16 %v718
        %v1015 = vunpack.c.l.b16 %v719
        %v1016 = vunpack.c.l.b16 %v720
        %v1017 = vunpack.c.l.b16 %v721
        %v1018 = vunpack.c.l.b16 %v722
        %v1019 = vunpack.c.l.b16 %v723
        %v1020 = vunpack.c.l.b16 %v724
        %v1021 = vunpack.c.l.b16 %v725
        %v1022 = vunpack.c.l.b16 %v726
        %v1023 = vunpack.c.l.b16 %v727
        %v1024 = vunpack.c.l.b16 %v728
        %v1025 = vunpack.c.l.b16 %v729
        %v1026 = vunpack.c.l.b16 %v730
        %v1027 = vunpack.c.l.b16 %v731
        %v1028 = vunpack.c.l.b16 %v732
        %v1029 = vunpack.c.l.b16 %v733
        %v1030 = vpack.c.b16 %v903, %v902
        %v1031 = vpack.c.b16 %v905, %v904
        %v1032 = vpack.c.b16 %v907, %v906
        %v1033 = vpack.c.b16 %v909, %v908
        %v1034 = vpack.c.b16 %v911, %v910
        %v1035 = vpack.c.b16 %v913, %v912
        %v1036 = vpack.c.b16 %v915, %v914
        %v1037 = vpack.c.b16 %v917, %v916
        %v1038 = vpack.c.b16 %v919, %v918
        %v1039 = vpack.c.b16 %v921, %v920
        %v1040 = vpack.c.b16 %v923, %v922
        %v1041 = vpack.c.b16 %v925, %v924
        %v1042 = vpack.c.b16 %v927, %v926
        %v1043 = vpack.c.b16 %v929, %v928
        %v1044 = vpack.c.b16 %v931, %v930
        %v1045 = vpack.c.b16 %v933, %v932
        %v1046 = vpack.c.b16 %v935, %v934
        %v1047 = vpack.c.b16 %v937, %v936
        %v1048 = vpack.c.b16 %v939, %v938
        %v1049 = vpack.c.b16 %v941, %v940
        %v1050 = vpack.c.b16 %v943, %v942
        %v1051 = vpack.c.b16 %v945, %v944
        %v1052 = vpack.c.b16 %v947, %v946
        %v1053 = vpack.c.b16 %v949, %v948
        %v1054 = vpack.c.b16 %v951, %v950
        %v1055 = vpack.c.b16 %v953, %v952
        %v1056 = vpack.c.b16 %v955, %v954
        %v1057 = vpack.c.b16 %v957, %v956
        %v1058 = vpack.c.b16 %v959, %v958
        %v1059 = vpack.c.b16 %v961, %v960
        %v1060 = vpack.c.b16 %v963, %v962
        %v1061 = vpack.c.b16 %v965, %v964
        %v1062 = vpack.c.b16 %v967, %v966
        %v1063 = vpack.c.b16 %v969, %v968
        %v1064 = vpack.c.b16 %v971, %v970
        %v1065 = vpack.c.b16 %v973, %v972
        %v1066 = vpack.c.b16 %v975, %v974
        %v1067 = vpack.c.b16 %v977, %v976
        %v1068 = vpack.c.b16 %v979, %v978
        %v1069 = vpack.c.b16 %v981, %v980
        %v1070 = vpack.c.b16 %v983, %v982
        %v1071 = vpack.c.b16 %v985, %v984
        %v1072 = vpack.c.b16 %v987, %v986
        %v1073 = vpack.c.b16 %v989, %v988
        %v1074 = vpack.c.b16 %v991, %v990
        %v1075 = vpack.c.b16 %v993, %v992
        %v1076 = vpack.c.b16 %v995, %v994
        %v1077 = vpack.c.b16 %v997, %v996
        %v1078 = vpack.c.b16 %v999, %v998
        %v1079 = vpack.c.b16 %v1001, %v1000
        %v1080 = vpack.c.b16 %v1003, %v1002
        %v1081 = vpack.c.b16 %v1005, %v1004
        %v1082 = vpack.c.b16 %v1007, %v1006
        %v1083 = vpack.c.b16 %v1009, %v1008
        %v1084 = vpack.c.b16 %v1011, %v1010
        %v1085 = vpack.c.b16 %v1013, %v1012
        %v1086 = vpack.c.b16 %v1015, %v1014
        %v1087 = vpack.c.b16 %v1017, %v1016
        %v1088 = vpack.c.b16 %v1019, %v1018
        %v1089 = vpack.c.b16 %v1021, %v1020
        %v1090 = vpack.c.b16 %v1023, %v1022
        %v1091 = vpack.c.b16 %v1025, %v1024
        %v1092 = vpack.c.b16 %v1027, %v1026
        %v1093 = vpack.c.b16 %v1029, %v1028
        %1158 = vmatprep.subr.bf16.mxu0 0
        %1159 = vmatpush1.bf16.msra.mxu0 %v1030
        %1160 = vmatprep.subr.bf16.mxu0 0
        %1161 = vmatpush1.bf16.msra.mxu0 %v1031
        %1162 = vmatprep.subr.bf16.mxu0 0
        %1163 = vmatpush1.bf16.msra.mxu0 %v1032
        %1164 = vmatprep.subr.bf16.mxu0 0
        %1165 = vmatpush1.bf16.msra.mxu0 %v1033
        %1166 = vmatprep.subr.bf16.mxu0 0
        %1167 = vmatpush1.bf16.msra.mxu0 %v1034
        %1168 = vmatprep.subr.bf16.mxu0 0
        %1169 = vmatpush1.bf16.msra.mxu0 %v1035
        %1170 = vmatprep.subr.bf16.mxu0 0
        %1171 = vmatpush1.bf16.msra.mxu0 %v1036
        %1172 = vmatprep.subr.bf16.mxu0 0
        %1173 = vmatpush1.bf16.msra.mxu0 %v1037
        %1174 = vmatprep.subr.bf16.mxu0 0
        %1175 = vmatpush1.bf16.msra.mxu0 %v1038
        %1176 = vmatprep.subr.bf16.mxu0 0
        %1177 = vmatpush1.bf16.msra.mxu0 %v1039
        %1178 = vmatprep.subr.bf16.mxu0 0
        %1179 = vmatpush1.bf16.msra.mxu0 %v1040
        %1180 = vmatprep.subr.bf16.mxu0 0
        %1181 = vmatpush1.bf16.msra.mxu0 %v1041
        %1182 = vmatprep.subr.bf16.mxu0 0
        %1183 = vmatpush1.bf16.msra.mxu0 %v1042
        %1184 = vmatprep.subr.bf16.mxu0 0
        %1185 = vmatpush1.bf16.msra.mxu0 %v1043
        %1186 = vmatprep.subr.bf16.mxu0 0
        %1187 = vmatpush1.bf16.msra.mxu0 %v1044
        %1188 = vmatprep.subr.bf16.mxu0 0
        %1189 = vmatpush1.bf16.msra.mxu0 %v1045
        %1190 = vmatprep.mubr.bf16.mxu0 %v759
        %1191 = vmatmul.mubr.bf16.gmra.mrb[0].mxu0 %v758
        %v1192 = vpop.f32.mrb[0].mxu0
        %v1193 = vadd.f32 0.0, %v1192
        %v1194 = vpop.f32.mrb[0].mxu0
        %v1195 = vpop.f32.mrb[0].mxu0
        %v1196 = vadd.f32 0.0, %v1195
        %v1197 = vpop.f32.mrb[0].mxu0
        %1198 = vdwg.mxu0
        %1199 = vmatprep.subr.bf16.mxu0 0
        %1200 = vmatpush1.bf16.msra.mxu0 %v1046
        %1201 = vmatprep.subr.bf16.mxu0 0
        %1202 = vmatpush1.bf16.msra.mxu0 %v1047
        %1203 = vmatprep.subr.bf16.mxu0 0
        %1204 = vmatpush1.bf16.msra.mxu0 %v1048
        %1205 = vmatprep.subr.bf16.mxu0 0
        %1206 = vmatpush1.bf16.msra.mxu0 %v1049
        %1207 = vmatprep.subr.bf16.mxu0 0
        %1208 = vmatpush1.bf16.msra.mxu0 %v1050
        %1209 = vmatprep.subr.bf16.mxu0 0
        %1210 = vmatpush1.bf16.msra.mxu0 %v1051
        %1211 = vmatprep.subr.bf16.mxu0 0
        %1212 = vmatpush1.bf16.msra.mxu0 %v1052
        %1213 = vmatprep.subr.bf16.mxu0 0
        %1214 = vmatpush1.bf16.msra.mxu0 %v1053
        %1215 = vmatprep.subr.bf16.mxu0 0
        %1216 = vmatpush1.bf16.msra.mxu0 %v1054
        %1217 = vmatprep.subr.bf16.mxu0 0
        %1218 = vmatpush1.bf16.msra.mxu0 %v1055
        %1219 = vmatprep.subr.bf16.mxu0 0
        %1220 = vmatpush1.bf16.msra.mxu0 %v1056
        %1221 = vmatprep.subr.bf16.mxu0 0
        %1222 = vmatpush1.bf16.msra.mxu0 %v1057
        %1223 = vmatprep.subr.bf16.mxu0 0
        %1224 = vmatpush1.bf16.msra.mxu0 %v1058
        %1225 = vmatprep.subr.bf16.mxu0 0
        %1226 = vmatpush1.bf16.msra.mxu0 %v1059
        %1227 = vmatprep.subr.bf16.mxu0 0
        %1228 = vmatpush1.bf16.msra.mxu0 %v1060
        %1229 = vmatprep.subr.bf16.mxu0 0
        %1230 = vmatpush1.bf16.msra.mxu0 %v1061
        %1231 = vmatprep.mubr.bf16.mxu0 %v761
        %1232 = vmatmul.mubr.bf16.gmra.mrb[0].mxu0 %v760
        %v1233 = vpop.f32.mrb[0].mxu0
        %v1234 = vadd.f32 %v1193, %v1233
        %v1235 = vpop.f32.mrb[0].mxu0
        %v1236 = vpop.f32.mrb[0].mxu0
        %v1237 = vadd.f32 %v1196, %v1236
        %v1238 = vpop.f32.mrb[0].mxu0
        %1239 = vdwg.mxu0
        %1240 = vmatprep.subr.bf16.mxu0 0
        %1241 = vmatpush1.bf16.msra.mxu0 %v1062
        %1242 = vmatprep.subr.bf16.mxu0 0
        %1243 = vmatpush1.bf16.msra.mxu0 %v1063
        %1244 = vmatprep.subr.bf16.mxu0 0
        %1245 = vmatpush1.bf16.msra.mxu0 %v1064
        %1246 = vmatprep.subr.bf16.mxu0 0
        %1247 = vmatpush1.bf16.msra.mxu0 %v1065
        %1248 = vmatprep.subr.bf16.mxu0 0
        %1249 = vmatpush1.bf16.msra.mxu0 %v1066
        %1250 = vmatprep.subr.bf16.mxu0 0
        %1251 = vmatpush1.bf16.msra.mxu0 %v1067
        %1252 = vmatprep.subr.bf16.mxu0 0
        %1253 = vmatpush1.bf16.msra.mxu0 %v1068
        %1254 = vmatprep.subr.bf16.mxu0 0
        %1255 = vmatpush1.bf16.msra.mxu0 %v1069
        %1256 = vmatprep.subr.bf16.mxu0 0
        %1257 = vmatpush1.bf16.msra.mxu0 %v1070
        %1258 = vmatprep.subr.bf16.mxu0 0
        %1259 = vmatpush1.bf16.msra.mxu0 %v1071
        %1260 = vmatprep.subr.bf16.mxu0 0
        %1261 = vmatpush1.bf16.msra.mxu0 %v1072
        %1262 = vmatprep.subr.bf16.mxu0 0
        %1263 = vmatpush1.bf16.msra.mxu0 %v1073
        %1264 = vmatprep.subr.bf16.mxu0 0
        %1265 = vmatpush1.bf16.msra.mxu0 %v1074
        %1266 = vmatprep.subr.bf16.mxu0 0
        %1267 = vmatpush1.bf16.msra.mxu0 %v1075
        %1268 = vmatprep.subr.bf16.mxu0 0
        %1269 = vmatpush1.bf16.msra.mxu0 %v1076
        %1270 = vmatprep.subr.bf16.mxu0 0
        %1271 = vmatpush1.bf16.msra.mxu0 %v1077
        %1272 = vmatprep.mubr.bf16.mxu0 %v763
        %1273 = vmatmul.mubr.bf16.gmra.mrb[0].mxu0 %v762
        %v1274 = vpop.f32.mrb[0].mxu0
        %v1275 = vadd.f32 %v1234, %v1274
        %v1276 = vpop.f32.mrb[0].mxu0
        %v1277 = vpop.f32.mrb[0].mxu0
        %v1278 = vadd.f32 %v1237, %v1277
        %v1279 = vpop.f32.mrb[0].mxu0
        %1280 = vdwg.mxu0
        %1281 = vmatprep.subr.bf16.mxu0 0
        %1282 = vmatpush1.bf16.msra.mxu0 %v1078
        %1283 = vmatprep.subr.bf16.mxu0 0
        %1284 = vmatpush1.bf16.msra.mxu0 %v1079
        %1285 = vmatprep.subr.bf16.mxu0 0
        %1286 = vmatpush1.bf16.msra.mxu0 %v1080
        %1287 = vmatprep.subr.bf16.mxu0 0
        %1288 = vmatpush1.bf16.msra.mxu0 %v1081
        %1289 = vmatprep.subr.bf16.mxu0 0
        %1290 = vmatpush1.bf16.msra.mxu0 %v1082
        %1291 = vmatprep.subr.bf16.mxu0 0
        %1292 = vmatpush1.bf16.msra.mxu0 %v1083
        %1293 = vmatprep.subr.bf16.mxu0 0
        %1294 = vmatpush1.bf16.msra.mxu0 %v1084
        %1295 = vmatprep.subr.bf16.mxu0 0
        %1296 = vmatpush1.bf16.msra.mxu0 %v1085
        %1297 = vmatprep.subr.bf16.mxu0 0
        %1298 = vmatpush1.bf16.msra.mxu0 %v1086
        %1299 = vmatprep.subr.bf16.mxu0 0
        %1300 = vmatpush1.bf16.msra.mxu0 %v1087
        %1301 = vmatprep.subr.bf16.mxu0 0
        %1302 = vmatpush1.bf16.msra.mxu0 %v1088
        %1303 = vmatprep.subr.bf16.mxu0 0
        %1304 = vmatpush1.bf16.msra.mxu0 %v1089
        %1305 = vmatprep.subr.bf16.mxu0 0
        %1306 = vmatpush1.bf16.msra.mxu0 %v1090
        %1307 = vmatprep.subr.bf16.mxu0 0
        %1308 = vmatpush1.bf16.msra.mxu0 %v1091
        %1309 = vmatprep.subr.bf16.mxu0 0
        %1310 = vmatpush1.bf16.msra.mxu0 %v1092
        %1311 = vmatprep.subr.bf16.mxu0 0
        %1312 = vmatpush1.bf16.msra.mxu0 %v1093
        %1313 = vmatprep.mubr.bf16.mxu0 %v765
        %1314 = vmatmul.mubr.bf16.gmra.mrb[0].mxu0 %v764
        %v1315 = vpop.f32.mrb[0].mxu0
        %v1316 = vadd.f32 %v1275, %v1315
        %v1317 = vpop.f32.mrb[0].mxu0
        %v1318 = vpop.f32.mrb[0].mxu0
        %v1319 = vadd.f32 %v1278, %v1318
        %v1320 = vpop.f32.mrb[0].mxu0
        %1321 = vdwg.mxu0
        %v1322 = vadd.f32 %v596, %v1316
        %v1323 = vadd.f32 %v597, %v1319
        %vm1324 = vcmask 64512
        %1325 = vst.msk [vmem:[#allocation2] sm:$0xff] %vm1324, %v1322
        %1326 = vst.msk [vmem:[#allocation2 + $0x8] sm:$0xff] %vm1324, %v1323
      $region60: #{m_dbpnet_forward.1} parent=47 // pred_fallthru
        _
      %p1327 = scmp.eq.s32.totalorder %s23, 1
      // Predicated region
      $region61: #{m_dbpnet_forward.1} parent=47 // pred_check
        %p1328 = pneg %p1327
      $region62: #{m_dbpnet_forward.1} parent=47 // pred_check_branch
        %1330 = sbr.rel (%p1328) target = $region64
      $region63: #{m_dbpnet_forward.1} parent=47 // pred_region
        %v1331 = vld [vmem:[#allocation2] sm:$0xff]
        %v1332 = vld [vmem:[#allocation2 + $0x8] sm:$0xff]
        %v1333 = vld [vmem:[%s4] sm:$0x1]
        %v1335 = vlaneseq
        %v1336 = vshrl.u32 %v1335, 7
        %v1337 = vsub.s32 0, %v1336
        %v1338 = vrot.slane %v1333, %v1337
        %v1340 = vadd.f32 %v1331, %v1338
        %v1341 = vadd.f32 %v1332, %v1338
        %v1342 = vmax.f32 %v1340, 0.0
        %v1343 = vmax.f32 %v1341, 0.0
        %v1344 = vld [vmem:[%s5] sm:$0xff]
        %v1345 = vld [vmem:[%s6] sm:$0x1]
        %v1347 = vlaneseq
        %v1348 = vshrl.u32 %v1347, 7
        %v1349 = vsub.s32 0, %v1348
        %v1350 = vrot.slane %v1345, %v1349
        %vm1352 = vcmask 64512
        %v1354 = vsel %vm1352, %v1342, 0
        %v1357 = vsel %vm1352, %v1343, 0
        %1359 = vmatprep.subr.mxu0 0.0
        %1360 = vmatpush1.msra.mxu0 %v1344
        %1361 = vmatprep.subr.mxu0 0.0
        %1362 = vmatpush1.msra.mxu0 0.0
        %1363 = vmatprep.subr.mxu0 0.0
        %1364 = vmatpush1.msra.mxu0 0.0
        %1365 = vmatprep.subr.mxu0 0.0
        %1366 = vmatpush1.msra.mxu0 0.0
        %1367 = vmatprep.subr.mxu0 0.0
        %1368 = vmatpush1.msra.mxu0 0.0
        %1369 = vmatprep.subr.mxu0 0.0
        %1370 = vmatpush1.msra.mxu0 0.0
        %1371 = vmatprep.subr.mxu0 0.0
        %1372 = vmatpush1.msra.mxu0 0.0
        %1373 = vmatprep.subr.mxu0 0.0
        %1374 = vmatpush1.msra.mxu0 0.0
        %1375 = vmatprep.subr.mxu0 0.0
        %1376 = vmatpush1.msra.mxu0 0.0
        %1377 = vmatprep.subr.mxu0 0.0
        %1378 = vmatpush1.msra.mxu0 0.0
        %1379 = vmatprep.subr.mxu0 0.0
        %1380 = vmatpush1.msra.mxu0 0.0
        %1381 = vmatprep.subr.mxu0 0.0
        %1382 = vmatpush1.msra.mxu0 0.0
        %1383 = vmatprep.subr.mxu0 0.0
        %1384 = vmatpush1.msra.mxu0 0.0
        %1385 = vmatprep.subr.mxu0 0.0
        %1386 = vmatpush1.msra.mxu0 0.0
        %1387 = vmatprep.subr.mxu0 0.0
        %1388 = vmatpush1.msra.mxu0 0.0
        %1389 = vmatprep.subr.mxu0 0.0
        %1390 = vmatpush1.msra.mxu0 0.0
        %1391 = vmatprep.subr.mxu0 0.0
        %1392 = vmatpush1.msra.mxu0 0.0
        %1393 = vmatprep.subr.mxu0 0.0
        %1394 = vmatpush1.msra.mxu0 0.0
        %1395 = vmatprep.subr.mxu0 0.0
        %1396 = vmatpush1.msra.mxu0 0.0
        %1397 = vmatprep.subr.mxu0 0.0
        %1398 = vmatpush1.msra.mxu0 0.0
        %1399 = vmatprep.subr.mxu0 0.0
        %1400 = vmatpush1.msra.mxu0 0.0
        %1401 = vmatprep.subr.mxu0 0.0
        %1402 = vmatpush1.msra.mxu0 0.0
        %1403 = vmatprep.subr.mxu0 0.0
        %1404 = vmatpush1.msra.mxu0 0.0
        %1405 = vmatprep.subr.mxu0 0.0
        %1406 = vmatpush1.msra.mxu0 0.0
        %1407 = vmatprep.subr.mxu0 0.0
        %1408 = vmatpush1.msra.mxu0 0.0
        %1409 = vmatprep.subr.mxu0 0.0
        %1410 = vmatpush1.msra.mxu0 0.0
        %1411 = vmatprep.subr.mxu0 0.0
        %1412 = vmatpush1.msra.mxu0 0.0
        %1413 = vmatprep.subr.mxu0 0.0
        %1414 = vmatpush1.msra.mxu0 0.0
        %1415 = vmatprep.subr.mxu0 0.0
        %1416 = vmatpush1.msra.mxu0 0.0
        %1417 = vmatprep.subr.mxu0 0.0
        %1418 = vmatpush1.msra.mxu0 0.0
        %1419 = vmatprep.subr.mxu0 0.0
        %1420 = vmatpush1.msra.mxu0 0.0
        %1421 = vmatprep.subr.mxu0 0.0
        %1422 = vmatpush1.msra.mxu0 0.0
        %1423 = vmatprep.mubr.f32.mxu0 0.0
        %1424 = vmatmul.mubr.f32.gmra.mrb[0].mxu0 %v1354
        %v1425 = vpop.f32.mrb[0].mxu0
        %v1426 = vadd.f32 %v1350, %v1425
        %v1427 = vpop.f32.mrb[0].mxu0
        %1428 = vmatprep.mubr.f32.mxu0 0.0
        %1429 = vmatmul.mubr.f32.gmra.mrb[0].mxu0 %v1357
        %v1430 = vpop.f32.mrb[0].mxu0
        %v1431 = vadd.f32 %v1350, %v1430
        %v1432 = vpop.f32.mrb[0].mxu0
        %1433 = vdwg.mxu0
        %vm1434 = vcmask 15360
        %1435 = vst.msk [vmem:[%s458] sm:$0xff] %vm1434, %v1426
        %1436 = vst.msk [vmem:[%s458 + $0x8] sm:$0xff] %vm1434, %v1431
      $region64: #{m_dbpnet_forward.1} parent=47 // pred_fallthru
        _
      %s1437 = smul.u32 2, %s22
      %p1438 = scmp.lt.s32.totalorder %s1437, 1
      %s1439 = scalar_select %p1438, %s1437, 1
      %s1440 = smul.addr %s1439, 8
      %s1441 = scalar_lea.vmem %s7, %s1440
      // Predicated region
      $region65: #{m_dbpnet_forward.1} parent=47 // pred_check
        %p1442 = pneg %p239
      $region66: #{m_dbpnet_forward.1} parent=47 // pred_check_branch
        %1444 = sbr.rel (%p1442) target = $region68
      $region67: #{m_dbpnet_forward.1} parent=47 // pred_region
        %s1445 = smul.u32 2, %s22
      $region68: #{m_dbpnet_forward.1} parent=47 // pred_fallthru
        _
      // Predicated region
      $region69: #{m_dbpnet_forward.1} parent=47 // pred_check
        %p1446 = pneg %p239
      $region70: #{m_dbpnet_forward.1} parent=47 // pred_check_branch
        %1448 = sbr.rel (%p1446) target = $region72
      $region71: #{m_dbpnet_forward.1} parent=47 // pred_region
        %s1449 = smul.u32 2, %s22
        %p1450 = scmp.lt.s32.totalorder %s1449, 1
        %s1451 = scalar_select %p1450, %s1449, 1
        %s1452 = smul.addr %s1451, 8
        %s1453 = scalar_lea.vmem %s7, %s1452
      $region72: #{m_dbpnet_forward.1} parent=47 // pred_fallthru
        _
    $region48: #{m_dbpnet_forward.1} parent=5 // pred_fallthru
      _
    %p1454 = scmp.le.s32.totalorder 2, %s13
    // Predicated region
    $region73: #{m_dbpnet_forward.1} parent=5 // pred_check
      %p1455 = pneg %p1454
    $region74: #{m_dbpnet_forward.1} parent=5 // pred_check_branch
      %1457 = sbr.rel (%p1455) target = $region76
    $region75: #{m_dbpnet_forward.1} parent=5 // pred_region
      %s1458 = ssub.s32 %s13, 2
    $region76: #{m_dbpnet_forward.1} parent=5 // pred_fallthru
      _
  $region6: #{m_dbpnet_forward.1} parent=0 // loop_footer
    %s17 = sadd.s32 1, %s13
  $region7: #{m_dbpnet_forward.1} parent=0 // loop_footer_branch
    %12 = sbr.rel target = $region3
  $region8: #{m_dbpnet_forward.1} parent=0 // loop_exit
    _

</llo_original>
